<compile_context>
chip_gen: v7x
topology: tpu7x:2x2x1
jax: 0.10.0
libtpu: 0.0.40
codegen_flags: <defaults>
</compile_context>

<pallas_src>
import jax
import jax.numpy as jnp
from jax.experimental import pallas as pl
from jax.experimental.pallas import tpu as pltpu

_LANE = 1024        # lane-dense last dim (8 x 128)
_BLOCK_ROWS = 512   # 512 x 1024 f32 = 2 MiB per block
_SMALL = _LANE      # below ~one vreg-row of work, skip Pallas (launch overhead dominates)


def _add_one_kernel(x_ref, o_ref):
    # Pure VPU elementwise; weak-typed `1` preserves the input dtype.
    o_ref[...] = x_ref[...] + 1


def my_module_forward(x):
    """Equivalent of My_Moudle.forward: output = input + 1 (same shape/dtype)."""
    x = jnp.asarray(x)
    n = x.size

    # Scalar / tiny inputs: plain JAX, no kernel launch.
    if n < _SMALL:
        return x + 1

    orig_shape = x.shape
    orig_dtype = x.dtype

    # Flatten and pad to a lane-dense (rows, _LANE) slab.
    flat = x.reshape(-1)
    pad = (-n) % _LANE
    padded = jnp.pad(flat, (0, pad)) if pad else flat
    rows = padded.size // _LANE
    x2d = padded.reshape(rows, _LANE)

    # Block rows: full extent if the slab is small (a full-array dim satisfies
    # the (8,128) rule), otherwise 512 (a multiple of 8).  A ragged last block
    # is handled by Pallas' automatic masking.
    block_rows = min(rows, _BLOCK_ROWS)
    grid = (pl.cdiv(rows, block_rows),)

    out2d = pl.pallas_call(
        _add_one_kernel,
        out_shape=jax.ShapeDtypeStruct((rows, _LANE), orig_dtype),
        grid=grid,
        in_specs=[pl.BlockSpec((block_rows, _LANE), lambda i: (i, 0))],
        out_specs=pl.BlockSpec((block_rows, _LANE), lambda i: (i, 0)),
        compiler_params=pltpu.CompilerParams(
            dimension_semantics=("parallel",)),
    )(x2d)

    return out2d.reshape(-1)[:n].reshape(orig_shape)


if __name__ == "__main__":
    key = jax.random.PRNGKey(0)
    k1, k2 = jax.random.split(key)

    # 1) Mirror the reference usage: x = torch.tensor(1.0)  (short-circuit path).
    x_scalar = jnp.array(1.0, dtype=jnp.float32)
    y_scalar = jax.block_until_ready(my_module_forward(x_scalar))
    assert y_scalar.shape == x_scalar.shape
    assert y_scalar.dtype == x_scalar.dtype
    assert jnp.allclose(y_scalar, x_scalar + 1.0)

    # 2) Small batched f32 input through the tiled Pallas path (no padding needed).
    x_f32 = jax.random.normal(k1, (2, 4, 16, 16), dtype=jnp.float32)
    y_f32 = jax.block_until_ready(my_module_forward(x_f32))
    assert y_f32.shape == x_f32.shape and y_f32.dtype == x_f32.dtype
    assert jnp.allclose(y_f32, x_f32 + 1.0)

    # 3) bf16 input with a non-128-multiple flat size (exercises the pad path,
    #    dtype preserved -> half the HBM bytes of an f32 upcast).
    x_bf16 = jax.random.normal(k2, (8, 300), dtype=jnp.bfloat16)
    y_bf16 = jax.block_until_ready(my_module_forward(x_bf16))
    assert y_bf16.shape == x_bf16.shape and y_bf16.dtype == jnp.bfloat16
    assert jnp.array_equal(y_bf16, x_bf16 + 1)

    # 4) Integer dtype preserved, matching torch's `x + 1` semantics.
    x_i32 = jnp.arange(4096, dtype=jnp.int32).reshape(4, 1024)
    y_i32 = jax.block_until_ready(my_module_forward(x_i32))
    assert y_i32.dtype == jnp.int32
    assert jnp.array_equal(y_i32, x_i32 + 1)

    print("KERNEL_OK")
</pallas_src>

<mosaic_0001>
module attributes {stable_mosaic.version = 11 : i64} {
  func.func @_add_one_kernel(%arg0: i32, %arg1: memref<2x1024xf32, #tpu.memory_space<vmem>>, %arg2: memref<2x1024xf32, #tpu.memory_space<vmem>>) attributes {dimension_semantics = [#tpu.dimension_semantics<parallel>], iteration_bounds = array<i64: 1>, scalar_prefetch = 0 : i64, scratch_operands = 0 : i64, tpu.core_type = #tpu.core_type<tc>, window_params = [{transform_indices = @transform_0, window_bounds = array<i64: 2, 1024>}, {transform_indices = @transform_1, window_bounds = array<i64: 2, 1024>}]} {
    %c0 = arith.constant 0 : index
    %c0_0 = arith.constant 0 : index
    %0 = vector.load %arg1[%c0, %c0_0] : memref<2x1024xf32, #tpu.memory_space<vmem>>, vector<2x1024xf32>
    %cst = arith.constant 1.000000e+00 : f32
    %1 = vector.broadcast %cst : f32 to vector<2x1024xf32>
    %2 = arith.addf %0, %1 : vector<2x1024xf32>
    %c0_1 = arith.constant 0 : index
    %c0_2 = arith.constant 0 : index
    %3 = vector.load %arg2[%c0_1, %c0_2] : memref<2x1024xf32, #tpu.memory_space<vmem>>, vector<2x1024xf32>
    tpu.vector_store %arg2[%c0_1, %c0_2], %2 {strides = array<i32>} : memref<2x1024xf32, #tpu.memory_space<vmem>>, vector<2x1024xf32>,
    return
  }
  func.func @transform_0(%arg0: i32) -> (i32, i32) {
    %c0_i32 = arith.constant 0 : i32
    %c0_i32_0 = arith.constant 0 : i32
    return %arg0, %c0_i32 : i32, i32
  }
  func.func @transform_1(%arg0: i32) -> (i32, i32) {
    %c0_i32 = arith.constant 0 : i32
    %c0_i32_0 = arith.constant 0 : i32
    return %arg0, %c0_i32 : i32, i32
  }
}

</mosaic_0001>

<llo_original>
// kernel: tpu_custom_call.1
$region0: #{tpu_custom_call.1}
  #allocation0 [shape = 'u32[]', space=smem, size = 0x4, offset = 0x4, fixed_abs, tag = 'smem constant byte address 0x4 - core index']
  #allocation1 [shape = 'u32[144,128]{1,0:T(1,128)}', space=vmem, size = 0x12000, scoped, tag = 'internal scratch']
  %s0 = inlined_call_operand.hbm [shape: f32[2,1024], index: 0, kind: input, shape index: {}]
  %s1 = inlined_call_operand.hbm [shape: f32[2,1024], index: 1, kind: output, shape index: {}]
  %s2 = sld [smem:[#allocation0]]
  $region18: #{tpu_custom_call.1} parent=0
    _
  %s4 = ssub.s32 1, %s2
  %s5 = scalar_select 0, %s4, %s2
  $region1: #{tpu_custom_call.1} parent=0
    #allocation2 [shape = 'u8[8192]{0}', space=vmem, size = 0x2000, scoped, tag = 'input window, operand 0, single buffered']
    #allocation3 [shape = 's32[1]{0}', space=sflag, size = 0x4, scoped, tag = 'scoped memory for tpu_custom_call.1']
    #allocation4 [shape = 's32[1]{0}', space=sflag, size = 0x4, scoped, tag = 'scoped memory for tpu_custom_call.1']
    #allocation5 [shape = 'u8[8192]{0}', space=vmem, size = 0x2000, scoped, tag = 'output window, operand 0, single buffered']
    %6 = vsyncpa [#allocation3], 0
    %7 = vsyncpa [#allocation4], 0
    // Predicated region
    $region2: #{tpu_custom_call.1} parent=1 // pred_check
      _
    $region3: #{tpu_custom_call.1} parent=1 // pred_check_branch
      %9 = sbr.rel (0) target = $region5
    $region4: #{tpu_custom_call.1} parent=1 // pred_region
      %s11 = ssub.s32 256, 256
      %12 = vsyncadd [#allocation3], %s11
      %s14 = sshll.u32 [#allocation2], 4
      %s15 = int_to_ptr.vmem [resolvable:$true] %s14
      %17 = dma.hbm_to_vmem [thread:$0]  %s0, 256, %s15, [#allocation3]
    $region5: #{tpu_custom_call.1} parent=1 // pred_fallthru
      _
    // Predicated region
    $region6: #{tpu_custom_call.1} parent=1 // pred_check
      _
    $region7: #{tpu_custom_call.1} parent=1 // pred_check_branch
      %19 = sbr.rel (0) target = $region9
    $region8: #{tpu_custom_call.1} parent=1 // pred_region
      %20 = dma.done [#allocation3], 256
    $region9: #{tpu_custom_call.1} parent=1 // pred_fallthru
      _
    %v21 = vld [vmem:[#allocation2] sm:$0xff]
    %v22 = vld [vmem:[#allocation2 + $0x8] sm:$0xff]
    %v23 = vadd.f32 %v21, 1.0
    %v24 = vadd.f32 %v22, 1.0
    %25 = vst [vmem:[#allocation5] sm:$0xff] %v23
    %26 = vst [vmem:[#allocation5 + $0x8] sm:$0xff] %v24
    // Predicated region
    $region10: #{tpu_custom_call.1} parent=1 // pred_check
      _
    $region11: #{tpu_custom_call.1} parent=1 // pred_check_branch
      %28 = sbr.rel (0) target = $region13
    $region12: #{tpu_custom_call.1} parent=1 // pred_region
      %s30 = ssub.s32 256, 256
      %31 = vsyncadd [#allocation4], %s30
      %s33 = sshll.u32 [#allocation5], 4
      %s34 = int_to_ptr.vmem [resolvable:$true] %s33
      %36 = dma.vmem_to_hbm [thread:$0]  %s34, 256, %s1, [#allocation4]
    $region13: #{tpu_custom_call.1} parent=1 // pred_fallthru
      _
    // Predicated region
    $region14: #{tpu_custom_call.1} parent=1 // pred_check
      _
    $region15: #{tpu_custom_call.1} parent=1 // pred_check_branch
      %38 = sbr.rel (0) target = $region17
    $region16: #{tpu_custom_call.1} parent=1 // pred_region
      %39 = dma.done [#allocation4], 256
    $region17: #{tpu_custom_call.1} parent=1 // pred_fallthru
      _
    %40 = vsyncpa [#allocation3], 1
    %41 = vsyncpa [#allocation4], 1

</llo_original>
